<compile_context>
chip_gen: v5e
topology: v5e:2x2
jax: 0.10.0
libtpu: 0.0.40
codegen_flags: <defaults>
</compile_context>

<pallas_src>
import functools

import jax
import jax.numpy as jnp
from jax.experimental import pallas as pl
from jax.experimental.pallas import tpu as pltpu


# ----------------------------------------------------------------------------
# Fused Pallas kernel: one grid step == one view (full batch)
# ----------------------------------------------------------------------------

def _simsiam_kernel(x_ref, enc_w_ref, vecs_ref,
                    w1_ref, w2_ref, w3_ref, w4_ref, w5_ref,
                    out_ref, *, prev_dim, dim, pred_dim):
    eps = jnp.float32(1e-5)
    bf16 = jnp.bfloat16

    def batchnorm(h, gamma=None, beta=None):
        # training-mode BatchNorm1d: biased variance over the batch axis (f32).
        mean = jnp.mean(h, axis=0, keepdims=True)
        var = jnp.mean((h - mean) ** 2, axis=0, keepdims=True)
        hn = (h - mean) * jax.lax.rsqrt(var + eps)
        if gamma is not None:
            hn = hn * gamma + beta
        return hn

    # --- synthetic encoder: global avg pool (lane-dense H*W last) + Linear + ReLU
    x = x_ref[...]                                    # (B, C, H*W) f32
    pooled = jnp.mean(x, axis=-1)                     # (B, C)
    enc_b = vecs_ref[0:1, :prev_dim]                  # (1, prev_dim)
    h = jnp.dot(pooled.astype(bf16), enc_w_ref[...],
                preferred_element_type=jnp.float32) + enc_b
    y = jnp.maximum(h, 0.0)                           # (B, prev_dim)

    # --- projector ----------------------------------------------------------
    h = jnp.dot(y.astype(bf16), w1_ref[...], preferred_element_type=jnp.float32)
    h = jnp.maximum(
        batchnorm(h, vecs_ref[1:2, :prev_dim], vecs_ref[2:3, :prev_dim]), 0.0)

    h = jnp.dot(h.astype(bf16), w2_ref[...], preferred_element_type=jnp.float32)
    h = jnp.maximum(
        batchnorm(h, vecs_ref[3:4, :prev_dim], vecs_ref[4:5, :prev_dim]), 0.0)

    h = jnp.dot(h.astype(bf16), w3_ref[...], preferred_element_type=jnp.float32)
    z = batchnorm(h)                                  # (B, dim), BN affine=False

    # --- predictor ----------------------------------------------------------
    q = jnp.dot(z.astype(bf16), w4_ref[...], preferred_element_type=jnp.float32)
    q = jnp.maximum(
        batchnorm(q, vecs_ref[5:6, :pred_dim], vecs_ref[6:7, :pred_dim]), 0.0)
    p = jnp.dot(q.astype(bf16), w5_ref[...],
                preferred_element_type=jnp.float32) + vecs_ref[7:8, :dim]

    # single lane-dense (B, 2*dim) store: [z | p]
    out_ref[...] = jnp.concatenate([z, p], axis=-1)


# ----------------------------------------------------------------------------
# Wrappers (glue)
# ----------------------------------------------------------------------------

def _resident_spec(shape):
    # Full array as one block; same block (0,...) for both views -> stays in VMEM.
    nd = len(shape)
    return pl.BlockSpec(shape, lambda v, _nd=nd: (0,) * _nd)


def simsiam_pallas(x_stacked, params):
    """x_stacked: (2, B, C, H*W) f32. Returns (2, B, 2*dim) = [z | p] per view."""
    _, B, C, HW = x_stacked.shape
    prev_dim = params["w1"].shape[0]
    dim = params["w3"].shape[1]
    pred_dim = params["w4"].shape[1]

    kernel = functools.partial(_simsiam_kernel,
                               prev_dim=prev_dim, dim=dim, pred_dim=pred_dim)
    weights = (params["enc_w"], params["vecs"], params["w1"], params["w2"],
               params["w3"], params["w4"], params["w5"])

    return pl.pallas_call(
        kernel,
        out_shape=jax.ShapeDtypeStruct((2, B, 2 * dim), jnp.float32),
        grid=(2,),  # one grid step per view
        in_specs=[pl.BlockSpec((None, B, C, HW), lambda v: (v, 0, 0, 0))]
                 + [_resident_spec(w.shape) for w in weights],
        out_specs=pl.BlockSpec((None, B, 2 * dim), lambda v: (v, 0, 0)),
        compiler_params=pltpu.CompilerParams(
            dimension_semantics=("parallel",)),  # 2 TCs on v7x: one view each
    )(x_stacked, *weights)


@jax.jit
def simsiam_forward(x1, x2, params):
    B, C, H, W = x1.shape
    dim = params["w3"].shape[1]
    x = jnp.stack([x1, x2], axis=0).reshape(2, B, C, H * W)
    out = simsiam_pallas(x, params)
    z1, p1 = out[0, :, :dim], out[0, :, dim:]
    z2, p2 = out[1, :, :dim], out[1, :, dim:]
    return p1, p2, z1, z2


# ----------------------------------------------------------------------------
# Deterministic parameter construction
# ----------------------------------------------------------------------------

def make_params(key, c, prev_dim, dim, pred_dim):
    ks = jax.random.split(key, 6)
    s = 0.05
    bf16 = jnp.bfloat16

    # Pack all tiny per-feature vectors into one (8, dim) f32 array:
    #   row 0: enc_b  row 1: g1  row 2: b1  row 3: g2
    #   row 4: b2     row 5: g4  row 6: b4  row 7: b5
    vec_w = max(prev_dim, pred_dim, dim)
    vecs = jnp.zeros((8, vec_w), jnp.float32)
    vecs = vecs.at[0, :prev_dim].set(0.01)   # enc_b
    vecs = vecs.at[1, :prev_dim].set(1.0)    # g1 (b1 = 0)
    vecs = vecs.at[3, :prev_dim].set(1.0)    # g2 (b2 = 0)
    vecs = vecs.at[5, :pred_dim].set(1.0)    # g4 (b4 = 0)
    vecs = vecs.at[7, :dim].set(0.01)        # b5

    return {
        # synthetic encoder (stand-in for injected base_encoder)
        "enc_w": (s * jax.random.normal(ks[0], (c, prev_dim))).astype(bf16),
        # projector
        "w1": (s * jax.random.normal(ks[1], (prev_dim, prev_dim))).astype(bf16),
        "w2": (s * jax.random.normal(ks[2], (prev_dim, prev_dim))).astype(bf16),
        "w3": (s * jax.random.normal(ks[3], (prev_dim, dim))).astype(bf16),
        # predictor
        "w4": (s * jax.random.normal(ks[4], (dim, pred_dim))).astype(bf16),
        "w5": (s * jax.random.normal(ks[5], (pred_dim, dim))).astype(bf16),
        "vecs": vecs,
    }


if __name__ == "__main__":
    # small shapes consistent with the module (scaled-down dims)
    B, C, H, W = 8, 4, 16, 16
    PREV_DIM, DIM, PRED_DIM = 32, 64, 32

    key = jax.random.PRNGKey(0)
    k_x1, k_x2, k_p = jax.random.split(key, 3)
    x1 = jax.random.normal(k_x1, (B, C, H, W), jnp.float32)
    x2 = jax.random.normal(k_x2, (B, C, H, W), jnp.float32)
    params = make_params(k_p, C, PREV_DIM, DIM, PRED_DIM)

    p1, p2, z1, z2 = simsiam_forward(x1, x2, params)
    jax.block_until_ready((p1, p2, z1, z2))

    assert p1.shape == (B, DIM) and p2.shape == (B, DIM)
    assert z1.shape == (B, DIM) and z2.shape == (B, DIM)
    assert bool(jnp.all(jnp.isfinite(p1))) and bool(jnp.all(jnp.isfinite(p2)))
    assert bool(jnp.all(jnp.isfinite(z1))) and bool(jnp.all(jnp.isfinite(z2)))

    print("KERNEL_OK")
</pallas_src>

<mosaic_0001>
module attributes {stable_mosaic.version = 11 : i64} {
  func.func @_simsiam_kernel(%arg0: i32, %arg1: memref<1x8x4x256xf32, #tpu.memory_space<vmem>>, %arg2: memref<4x32xbf16, #tpu.memory_space<vmem>>, %arg3: memref<8x64xf32, #tpu.memory_space<vmem>>, %arg4: memref<32x32xbf16, #tpu.memory_space<vmem>>, %arg5: memref<32x32xbf16, #tpu.memory_space<vmem>>, %arg6: memref<32x64xbf16, #tpu.memory_space<vmem>>, %arg7: memref<64x32xbf16, #tpu.memory_space<vmem>>, %arg8: memref<32x64xbf16, #tpu.memory_space<vmem>>, %arg9: memref<1x8x128xf32, #tpu.memory_space<vmem>>) attributes {dimension_semantics = [#tpu.dimension_semantics<parallel>], iteration_bounds = array<i64: 2>, scalar_prefetch = 0 : i64, scratch_operands = 0 : i64, tpu.core_type = #tpu.core_type<tc>, window_params = [{transform_indices = @transform_0, window_bounds = array<i64: 1, 8, 4, 256>}, {pipeline_mode = #tpu.pipeline_mode<synchronous>, transform_indices = @transform_1, window_bounds = array<i64: 4, 32>}, {pipeline_mode = #tpu.pipeline_mode<synchronous>, transform_indices = @transform_2, window_bounds = array<i64: 8, 64>}, {pipeline_mode = #tpu.pipeline_mode<synchronous>, transform_indices = @transform_3, window_bounds = array<i64: 32, 32>}, {pipeline_mode = #tpu.pipeline_mode<synchronous>, transform_indices = @transform_4, window_bounds = array<i64: 32, 32>}, {pipeline_mode = #tpu.pipeline_mode<synchronous>, transform_indices = @transform_5, window_bounds = array<i64: 32, 64>}, {pipeline_mode = #tpu.pipeline_mode<synchronous>, transform_indices = @transform_6, window_bounds = array<i64: 64, 32>}, {pipeline_mode = #tpu.pipeline_mode<synchronous>, transform_indices = @transform_7, window_bounds = array<i64: 32, 64>}, {transform_indices = @transform_8, window_bounds = array<i64: 1, 8, 128>}]} {
    %c0 = arith.constant 0 : index
    %c0_0 = arith.constant 0 : index
    %c0_1 = arith.constant 0 : index
    %c0_2 = arith.constant 0 : index
    %0 = vector.load %arg1[%c0, %c0_0, %c0_1, %c0_2] : memref<1x8x4x256xf32, #tpu.memory_space<vmem>>, vector<1x8x4x256xf32>
    %1 = vector.shape_cast %0 : vector<1x8x4x256xf32> to vector<8x4x256xf32>
    %cst = arith.constant dense<0.000000e+00> : vector<8x4xf32>
    %2 = vector.multi_reduction <add>, %1, %cst [2] : vector<8x4x256xf32> to vector<8x4xf32>
    %cst_3 = arith.constant 2.560000e+02 : f32
    %3 = vector.broadcast %cst_3 : f32 to vector<8x4xf32>
    %4 = arith.divf %2, %3 : vector<8x4xf32>
    %c0_4 = arith.constant 0 : index
    %c0_5 = arith.constant 0 : index
    %5 = vector.load %arg3[%c0_4, %c0_5] : memref<8x64xf32, #tpu.memory_space<vmem>>, vector<1x32xf32>
    %6 = arith.truncf %4 : vector<8x4xf32> to vector<8x4xbf16>
    %c0_6 = arith.constant 0 : index
    %c0_7 = arith.constant 0 : index
    %7 = vector.load %arg2[%c0_6, %c0_7] : memref<4x32xbf16, #tpu.memory_space<vmem>>, vector<4x32xbf16>
    %cst_8 = arith.constant dense<0.000000e+00> : vector<8x32xf32>
    %8 = tpu.matmul %6, %7, %cst_8 {dimension_numbers = #tpu.dot_dimension_numbers<[1], [0], [0], [1], [0, 0, 1, 1], [], []>} : vector<8x4xbf16>, vector<4x32xbf16>, vector<8x32xf32> -> vector<8x32xf32>
    %9 = vector.broadcast %5 : vector<1x32xf32> to vector<8x32xf32>
    %10 = arith.addf %8, %9 : vector<8x32xf32>
    %cst_9 = arith.constant 0.000000e+00 : f32
    %11 = vector.broadcast %cst_9 : f32 to vector<8x32xf32>
    %12 = arith.maximumf %10, %11 : vector<8x32xf32>
    %13 = arith.truncf %12 : vector<8x32xf32> to vector<8x32xbf16>
    %c0_10 = arith.constant 0 : index
    %c0_11 = arith.constant 0 : index
    %14 = vector.load %arg4[%c0_10, %c0_11] : memref<32x32xbf16, #tpu.memory_space<vmem>>, vector<32x32xbf16>
    %cst_12 = arith.constant dense<0.000000e+00> : vector<8x32xf32>
    %15 = tpu.matmul %13, %14, %cst_12 {dimension_numbers = #tpu.dot_dimension_numbers<[1], [0], [0], [1], [0, 0, 1, 1], [], []>} : vector<8x32xbf16>, vector<32x32xbf16>, vector<8x32xf32> -> vector<8x32xf32>
    %c1 = arith.constant 1 : index
    %c0_13 = arith.constant 0 : index
    %16 = vector.load %arg3[%c1, %c0_13] : memref<8x64xf32, #tpu.memory_space<vmem>>, vector<1x32xf32>
    %c2 = arith.constant 2 : index
    %c0_14 = arith.constant 0 : index
    %17 = vector.load %arg3[%c2, %c0_14] : memref<8x64xf32, #tpu.memory_space<vmem>>, vector<1x32xf32>
    %cst_15 = arith.constant dense<0.000000e+00> : vector<32xf32>
    %18 = vector.multi_reduction <add>, %15, %cst_15 [0] : vector<8x32xf32> to vector<32xf32>
    %19 = vector.shape_cast %18 : vector<32xf32> to vector<1x32xf32>
    %cst_16 = arith.constant 8.000000e+00 : f32
    %20 = vector.broadcast %cst_16 : f32 to vector<1x32xf32>
    %21 = arith.divf %19, %20 : vector<1x32xf32>
    %22 = vector.broadcast %21 : vector<1x32xf32> to vector<8x32xf32>
    %23 = arith.subf %15, %22 : vector<8x32xf32>
    %24 = arith.mulf %23, %23 : vector<8x32xf32>
    %cst_17 = arith.constant dense<0.000000e+00> : vector<32xf32>
    %25 = vector.multi_reduction <add>, %24, %cst_17 [0] : vector<8x32xf32> to vector<32xf32>
    %26 = vector.shape_cast %25 : vector<32xf32> to vector<1x32xf32>
    %cst_18 = arith.constant 8.000000e+00 : f32
    %27 = vector.broadcast %cst_18 : f32 to vector<1x32xf32>
    %28 = arith.divf %26, %27 : vector<1x32xf32>
    %29 = vector.broadcast %21 : vector<1x32xf32> to vector<8x32xf32>
    %30 = arith.subf %15, %29 : vector<8x32xf32>
    %cst_19 = arith.constant 9.99999974E-6 : f32
    %31 = vector.broadcast %cst_19 : f32 to vector<1x32xf32>
    %32 = arith.addf %28, %31 : vector<1x32xf32>
    %33 = math.rsqrt %32 : vector<1x32xf32>
    %34 = vector.broadcast %33 : vector<1x32xf32> to vector<8x32xf32>
    %35 = arith.mulf %30, %34 : vector<8x32xf32>
    %36 = vector.broadcast %16 : vector<1x32xf32> to vector<8x32xf32>
    %37 = arith.mulf %35, %36 : vector<8x32xf32>
    %38 = vector.broadcast %17 : vector<1x32xf32> to vector<8x32xf32>
    %39 = arith.addf %37, %38 : vector<8x32xf32>
    %cst_20 = arith.constant 0.000000e+00 : f32
    %40 = vector.broadcast %cst_20 : f32 to vector<8x32xf32>
    %41 = arith.maximumf %39, %40 : vector<8x32xf32>
    %42 = arith.truncf %41 : vector<8x32xf32> to vector<8x32xbf16>
    %c0_21 = arith.constant 0 : index
    %c0_22 = arith.constant 0 : index
    %43 = vector.load %arg5[%c0_21, %c0_22] : memref<32x32xbf16, #tpu.memory_space<vmem>>, vector<32x32xbf16>
    %cst_23 = arith.constant dense<0.000000e+00> : vector<8x32xf32>
    %44 = tpu.matmul %42, %43, %cst_23 {dimension_numbers = #tpu.dot_dimension_numbers<[1], [0], [0], [1], [0, 0, 1, 1], [], []>} : vector<8x32xbf16>, vector<32x32xbf16>, vector<8x32xf32> -> vector<8x32xf32>
    %c3 = arith.constant 3 : index
    %c0_24 = arith.constant 0 : index
    %45 = vector.load %arg3[%c3, %c0_24] : memref<8x64xf32, #tpu.memory_space<vmem>>, vector<1x32xf32>
    %c4 = arith.constant 4 : index
    %c0_25 = arith.constant 0 : index
    %46 = vector.load %arg3[%c4, %c0_25] : memref<8x64xf32, #tpu.memory_space<vmem>>, vector<1x32xf32>
    %cst_26 = arith.constant dense<0.000000e+00> : vector<32xf32>
    %47 = vector.multi_reduction <add>, %44, %cst_26 [0] : vector<8x32xf32> to vector<32xf32>
    %48 = vector.shape_cast %47 : vector<32xf32> to vector<1x32xf32>
    %cst_27 = arith.constant 8.000000e+00 : f32
    %49 = vector.broadcast %cst_27 : f32 to vector<1x32xf32>
    %50 = arith.divf %48, %49 : vector<1x32xf32>
    %51 = vector.broadcast %50 : vector<1x32xf32> to vector<8x32xf32>
    %52 = arith.subf %44, %51 : vector<8x32xf32>
    %53 = arith.mulf %52, %52 : vector<8x32xf32>
    %cst_28 = arith.constant dense<0.000000e+00> : vector<32xf32>
    %54 = vector.multi_reduction <add>, %53, %cst_28 [0] : vector<8x32xf32> to vector<32xf32>
    %55 = vector.shape_cast %54 : vector<32xf32> to vector<1x32xf32>
    %cst_29 = arith.constant 8.000000e+00 : f32
    %56 = vector.broadcast %cst_29 : f32 to vector<1x32xf32>
    %57 = arith.divf %55, %56 : vector<1x32xf32>
    %58 = vector.broadcast %50 : vector<1x32xf32> to vector<8x32xf32>
    %59 = arith.subf %44, %58 : vector<8x32xf32>
    %cst_30 = arith.constant 9.99999974E-6 : f32
    %60 = vector.broadcast %cst_30 : f32 to vector<1x32xf32>
    %61 = arith.addf %57, %60 : vector<1x32xf32>
    %62 = math.rsqrt %61 : vector<1x32xf32>
    %63 = vector.broadcast %62 : vector<1x32xf32> to vector<8x32xf32>
    %64 = arith.mulf %59, %63 : vector<8x32xf32>
    %65 = vector.broadcast %45 : vector<1x32xf32> to vector<8x32xf32>
    %66 = arith.mulf %64, %65 : vector<8x32xf32>
    %67 = vector.broadcast %46 : vector<1x32xf32> to vector<8x32xf32>
    %68 = arith.addf %66, %67 : vector<8x32xf32>
    %cst_31 = arith.constant 0.000000e+00 : f32
    %69 = vector.broadcast %cst_31 : f32 to vector<8x32xf32>
    %70 = arith.maximumf %68, %69 : vector<8x32xf32>
    %71 = arith.truncf %70 : vector<8x32xf32> to vector<8x32xbf16>
    %c0_32 = arith.constant 0 : index
    %c0_33 = arith.constant 0 : index
    %72 = vector.load %arg6[%c0_32, %c0_33] : memref<32x64xbf16, #tpu.memory_space<vmem>>, vector<32x64xbf16>
    %cst_34 = arith.constant dense<0.000000e+00> : vector<8x64xf32>
    %73 = tpu.matmul %71, %72, %cst_34 {dimension_numbers = #tpu.dot_dimension_numbers<[1], [0], [0], [1], [0, 0, 1, 1], [], []>} : vector<8x32xbf16>, vector<32x64xbf16>, vector<8x64xf32> -> vector<8x64xf32>
    %cst_35 = arith.constant dense<0.000000e+00> : vector<64xf32>
    %74 = vector.multi_reduction <add>, %73, %cst_35 [0] : vector<8x64xf32> to vector<64xf32>
    %75 = vector.shape_cast %74 : vector<64xf32> to vector<1x64xf32>
    %cst_36 = arith.constant 8.000000e+00 : f32
    %76 = vector.broadcast %cst_36 : f32 to vector<1x64xf32>
    %77 = arith.divf %75, %76 : vector<1x64xf32>
    %78 = vector.broadcast %77 : vector<1x64xf32> to vector<8x64xf32>
    %79 = arith.subf %73, %78 : vector<8x64xf32>
    %80 = arith.mulf %79, %79 : vector<8x64xf32>
    %cst_37 = arith.constant dense<0.000000e+00> : vector<64xf32>
    %81 = vector.multi_reduction <add>, %80, %cst_37 [0] : vector<8x64xf32> to vector<64xf32>
    %82 = vector.shape_cast %81 : vector<64xf32> to vector<1x64xf32>
    %cst_38 = arith.constant 8.000000e+00 : f32
    %83 = vector.broadcast %cst_38 : f32 to vector<1x64xf32>
    %84 = arith.divf %82, %83 : vector<1x64xf32>
    %85 = vector.broadcast %77 : vector<1x64xf32> to vector<8x64xf32>
    %86 = arith.subf %73, %85 : vector<8x64xf32>
    %cst_39 = arith.constant 9.99999974E-6 : f32
    %87 = vector.broadcast %cst_39 : f32 to vector<1x64xf32>
    %88 = arith.addf %84, %87 : vector<1x64xf32>
    %89 = math.rsqrt %88 : vector<1x64xf32>
    %90 = vector.broadcast %89 : vector<1x64xf32> to vector<8x64xf32>
    %91 = arith.mulf %86, %90 : vector<8x64xf32>
    %92 = arith.truncf %91 : vector<8x64xf32> to vector<8x64xbf16>
    %c0_40 = arith.constant 0 : index
    %c0_41 = arith.constant 0 : index
    %93 = vector.load %arg7[%c0_40, %c0_41] : memref<64x32xbf16, #tpu.memory_space<vmem>>, vector<64x32xbf16>
    %cst_42 = arith.constant dense<0.000000e+00> : vector<8x32xf32>
    %94 = tpu.matmul %92, %93, %cst_42 {dimension_numbers = #tpu.dot_dimension_numbers<[1], [0], [0], [1], [0, 0, 1, 1], [], []>} : vector<8x64xbf16>, vector<64x32xbf16>, vector<8x32xf32> -> vector<8x32xf32>
    %c5 = arith.constant 5 : index
    %c0_43 = arith.constant 0 : index
    %95 = vector.load %arg3[%c5, %c0_43] : memref<8x64xf32, #tpu.memory_space<vmem>>, vector<1x32xf32>
    %c6 = arith.constant 6 : index
    %c0_44 = arith.constant 0 : index
    %96 = vector.load %arg3[%c6, %c0_44] : memref<8x64xf32, #tpu.memory_space<vmem>>, vector<1x32xf32>
    %cst_45 = arith.constant dense<0.000000e+00> : vector<32xf32>
    %97 = vector.multi_reduction <add>, %94, %cst_45 [0] : vector<8x32xf32> to vector<32xf32>
    %98 = vector.shape_cast %97 : vector<32xf32> to vector<1x32xf32>
    %cst_46 = arith.constant 8.000000e+00 : f32
    %99 = vector.broadcast %cst_46 : f32 to vector<1x32xf32>
    %100 = arith.divf %98, %99 : vector<1x32xf32>
    %101 = vector.broadcast %100 : vector<1x32xf32> to vector<8x32xf32>
    %102 = arith.subf %94, %101 : vector<8x32xf32>
    %103 = arith.mulf %102, %102 : vector<8x32xf32>
    %cst_47 = arith.constant dense<0.000000e+00> : vector<32xf32>
    %104 = vector.multi_reduction <add>, %103, %cst_47 [0] : vector<8x32xf32> to vector<32xf32>
    %105 = vector.shape_cast %104 : vector<32xf32> to vector<1x32xf32>
    %cst_48 = arith.constant 8.000000e+00 : f32
    %106 = vector.broadcast %cst_48 : f32 to vector<1x32xf32>
    %107 = arith.divf %105, %106 : vector<1x32xf32>
    %108 = vector.broadcast %100 : vector<1x32xf32> to vector<8x32xf32>
    %109 = arith.subf %94, %108 : vector<8x32xf32>
    %cst_49 = arith.constant 9.99999974E-6 : f32
    %110 = vector.broadcast %cst_49 : f32 to vector<1x32xf32>
    %111 = arith.addf %107, %110 : vector<1x32xf32>
    %112 = math.rsqrt %111 : vector<1x32xf32>
    %113 = vector.broadcast %112 : vector<1x32xf32> to vector<8x32xf32>
    %114 = arith.mulf %109, %113 : vector<8x32xf32>
    %115 = vector.broadcast %95 : vector<1x32xf32> to vector<8x32xf32>
    %116 = arith.mulf %114, %115 : vector<8x32xf32>
    %117 = vector.broadcast %96 : vector<1x32xf32> to vector<8x32xf32>
    %118 = arith.addf %116, %117 : vector<8x32xf32>
    %cst_50 = arith.constant 0.000000e+00 : f32
    %119 = vector.broadcast %cst_50 : f32 to vector<8x32xf32>
    %120 = arith.maximumf %118, %119 : vector<8x32xf32>
    %121 = arith.truncf %120 : vector<8x32xf32> to vector<8x32xbf16>
    %c0_51 = arith.constant 0 : index
    %c0_52 = arith.constant 0 : index
    %122 = vector.load %arg8[%c0_51, %c0_52] : memref<32x64xbf16, #tpu.memory_space<vmem>>, vector<32x64xbf16>
    %cst_53 = arith.constant dense<0.000000e+00> : vector<8x64xf32>
    %123 = tpu.matmul %121, %122, %cst_53 {dimension_numbers = #tpu.dot_dimension_numbers<[1], [0], [0], [1], [0, 0, 1, 1], [], []>} : vector<8x32xbf16>, vector<32x64xbf16>, vector<8x64xf32> -> vector<8x64xf32>
    %c7 = arith.constant 7 : index
    %c0_54 = arith.constant 0 : index
    %124 = vector.load %arg3[%c7, %c0_54] : memref<8x64xf32, #tpu.memory_space<vmem>>, vector<1x64xf32>
    %125 = vector.broadcast %124 : vector<1x64xf32> to vector<8x64xf32>
    %126 = arith.addf %123, %125 : vector<8x64xf32>
    %127 = tpu.concatenate %91, %126 in 1 : vector<8x64xf32>, vector<8x64xf32> -> vector<8x128xf32>
    %c0_55 = arith.constant 0 : index
    %c0_56 = arith.constant 0 : index
    %c0_57 = arith.constant 0 : index
    %128 = vector.load %arg9[%c0_55, %c0_56, %c0_57] : memref<1x8x128xf32, #tpu.memory_space<vmem>>, vector<1x8x128xf32>
    %129 = vector.shape_cast %128 : vector<1x8x128xf32> to vector<8x128xf32>
    %130 = vector.shape_cast %127 : vector<8x128xf32> to vector<1x8x128xf32>
    tpu.vector_store %arg9[%c0_55, %c0_56, %c0_57], %130 {strides = array<i32>} : memref<1x8x128xf32, #tpu.memory_space<vmem>>, vector<1x8x128xf32>,
    return
  }
  func.func @transform_0(%arg0: i32) -> (i32, i32, i32, i32) {
    %c0_i32 = arith.constant 0 : i32
    %c0_i32_0 = arith.constant 0 : i32
    %c0_i32_1 = arith.constant 0 : i32
    %c0_i32_2 = arith.constant 0 : i32
    return %arg0, %c0_i32, %c0_i32_0, %c0_i32_1 : i32, i32, i32, i32
  }
  func.func @transform_1(%arg0: i32) -> (i32, i32) {
    %c0_i32 = arith.constant 0 : i32
    %c0_i32_0 = arith.constant 0 : i32
    %c0_i32_1 = arith.constant 0 : i32
    return %c0_i32, %c0_i32_0 : i32, i32
  }
  func.func @transform_2(%arg0: i32) -> (i32, i32) {
    %c0_i32 = arith.constant 0 : i32
    %c0_i32_0 = arith.constant 0 : i32
    %c0_i32_1 = arith.constant 0 : i32
    return %c0_i32, %c0_i32_0 : i32, i32
  }
  func.func @transform_3(%arg0: i32) -> (i32, i32) {
    %c0_i32 = arith.constant 0 : i32
    %c0_i32_0 = arith.constant 0 : i32
    %c0_i32_1 = arith.constant 0 : i32
    return %c0_i32, %c0_i32_0 : i32, i32
  }
  func.func @transform_4(%arg0: i32) -> (i32, i32) {
    %c0_i32 = arith.constant 0 : i32
    %c0_i32_0 = arith.constant 0 : i32
    %c0_i32_1 = arith.constant 0 : i32
    return %c0_i32, %c0_i32_0 : i32, i32
  }
  func.func @transform_5(%arg0: i32) -> (i32, i32) {
    %c0_i32 = arith.constant 0 : i32
    %c0_i32_0 = arith.constant 0 : i32
    %c0_i32_1 = arith.constant 0 : i32
    return %c0_i32, %c0_i32_0 : i32, i32
  }
  func.func @transform_6(%arg0: i32) -> (i32, i32) {
    %c0_i32 = arith.constant 0 : i32
    %c0_i32_0 = arith.constant 0 : i32
    %c0_i32_1 = arith.constant 0 : i32
    return %c0_i32, %c0_i32_0 : i32, i32
  }
  func.func @transform_7(%arg0: i32) -> (i32, i32) {
    %c0_i32 = arith.constant 0 : i32
    %c0_i32_0 = arith.constant 0 : i32
    %c0_i32_1 = arith.constant 0 : i32
    return %c0_i32, %c0_i32_0 : i32, i32
  }
  func.func @transform_8(%arg0: i32) -> (i32, i32, i32) {
    %c0_i32 = arith.constant 0 : i32
    %c0_i32_0 = arith.constant 0 : i32
    %c0_i32_1 = arith.constant 0 : i32
    return %arg0, %c0_i32, %c0_i32_0 : i32, i32, i32
  }
}

</mosaic_0001>

<llo_original>
// kernel: simsiam_forward.1
$region0: #{simsiam_forward.1}
  #allocation0 [shape = 'u32[]', space=smem, size = 0x4, offset = 0x4, fixed_abs, tag = 'smem constant byte address 0x4 - core index']
  #allocation1 [shape = 'u32[72,128]{1,0:T(1,128)}', space=vmem, size = 0x9000, scoped, tag = 'internal scratch']
  %s0 = inlined_call_operand.vmem [shape: f32[2,8,4,256], index: 0, kind: input, shape index: {}]
  %s1 = inlined_call_operand.vmem [shape: bf16[4,32], index: 1, kind: input, shape index: {}]
  %s2 = inlined_call_operand.vmem [shape: f32[8,64], index: 2, kind: input, shape index: {}]
  %s3 = inlined_call_operand.vmem [shape: bf16[32,32], index: 3, kind: input, shape index: {}]
  %s4 = inlined_call_operand.vmem [shape: bf16[32,32], index: 4, kind: input, shape index: {}]
  %s5 = inlined_call_operand.vmem [shape: bf16[32,64], index: 5, kind: input, shape index: {}]
  %s6 = inlined_call_operand.vmem [shape: bf16[64,32], index: 6, kind: input, shape index: {}]
  %s7 = inlined_call_operand.vmem [shape: bf16[32,64], index: 7, kind: input, shape index: {}]
  %s8 = inlined_call_operand.vmem [shape: f32[2,8,128], index: 8, kind: output, shape index: {}]
  %s9 = sld [smem:[#allocation0]]
  $region65: #{simsiam_forward.1} parent=0
    _
  %s11 = ssub.s32 1, %s9
  %s12 = scalar_select 0, %s11, %s9
  loop: start=0, step=1, limit=4
  $region2: #{simsiam_forward.1} parent=0 // loop_pre_header
    _
  $region3: #{simsiam_forward.1} parent=0 // loop_header
    %s14 = sphi 0, %s18
    %p15 = scmp.ge.s32.totalorder %s14, 4
    %s24 = sphi 0, %s26
    %s27 = sphi 0, %s24
    %s28 = sphi 0, %s27
    %s44 = sphi 0, %s28
    %s48 = sphi 0, %s48
    %s50 = sphi 0, %s48
    %s51 = sphi 0, %s50
    %s65 = sphi 0, %s51
    %s69 = sphi 0, %s69
    %s71 = sphi 0, %s69
    %s72 = sphi 0, %s71
    %s86 = sphi 0, %s72
    %s90 = sphi 0, %s90
    %s92 = sphi 0, %s90
    %s93 = sphi 0, %s92
    %s107 = sphi 0, %s93
    %s111 = sphi 0, %s111
    %s113 = sphi 0, %s111
    %s114 = sphi 0, %s113
    %s128 = sphi 0, %s114
    %s132 = sphi 0, %s132
    %s134 = sphi 0, %s132
    %s135 = sphi 0, %s134
    %s149 = sphi 0, %s135
    %s153 = sphi 0, %s153
    %s155 = sphi 0, %s153
    %s156 = sphi 0, %s155
    %s170 = sphi 0, %s156
    %s174 = sphi 0, %s174
    %s176 = sphi 0, %s174
    %s177 = sphi 0, %s176
    %s191 = sphi 0, %s177
    %s197 = sphi 0, %s199
    %s200 = sphi 0, %s197
    %s201 = sphi 0, %s200
    %s217 = sphi 0, %s201
  $region4: #{simsiam_forward.1} parent=0 // loop_header_branch
    %17 = sbr.rel (%p15) target = $region8
  $region5: #{simsiam_forward.1} parent=0 // loop_body
    %s19 = ssub.s32 %s14, 1
    %s20 = ssub.s32 %s14, 2
    %s21 = sadd.s32 %s14, 1
    %s22 = ssub.s32 %s14, %s21
    %p23 = scmp.eq.s32.totalorder %s22, 0
    %s25 = sadd.s32 %s24, 1
    %s26 = scalar_select %p23, %s24, %s25
    %p29 = pneg %p23
    %p30 = scmp.eq.s32.totalorder %s14, 1
    %p31 = por %p29, %p30
    %p32 = scmp.ne.s32.totalorder %s24, %s27
    %p33 = scmp.eq.s32.totalorder %s14, 0
    %p34 = por %p32, %p33
    %p35 = scmp.ne.s32.totalorder %s24, %s27
    %p36 = scmp.eq.s32.totalorder %s19, 1
    %p37 = por %p35, %p36
    %p38 = scmp.ne.s32.totalorder %s27, %s28
    %p39 = scmp.eq.s32.totalorder %s19, 0
    %p40 = por %p38, %p39
    %p41 = scmp.ne.s32.totalorder %s27, %s28
    %p42 = scmp.eq.s32.totalorder %s20, 1
    %p43 = por %p41, %p42
    %p45 = scmp.ne.s32.totalorder %s28, %s44
    %p46 = scmp.eq.s32.totalorder %s20, 0
    %p47 = por %p45, %p46
    %s49 = sadd.s32 %s48, 1
    %p52 = scmp.eq.s32.totalorder %s14, 1
    %p53 = scmp.ne.s32.totalorder %s48, %s50
    %p54 = scmp.eq.s32.totalorder %s14, 0
    %p55 = por %p53, %p54
    %p56 = scmp.ne.s32.totalorder %s48, %s50
    %p57 = scmp.eq.s32.totalorder %s19, 1
    %p58 = por %p56, %p57
    %p59 = scmp.ne.s32.totalorder %s50, %s51
    %p60 = scmp.eq.s32.totalorder %s19, 0
    %p61 = por %p59, %p60
    %p62 = scmp.ne.s32.totalorder %s50, %s51
    %p63 = scmp.eq.s32.totalorder %s20, 1
    %p64 = por %p62, %p63
    %p66 = scmp.ne.s32.totalorder %s51, %s65
    %p67 = scmp.eq.s32.totalorder %s20, 0
    %p68 = por %p66, %p67
    %s70 = sadd.s32 %s69, 1
    %p73 = scmp.eq.s32.totalorder %s14, 1
    %p74 = scmp.ne.s32.totalorder %s69, %s71
    %p75 = scmp.eq.s32.totalorder %s14, 0
    %p76 = por %p74, %p75
    %p77 = scmp.ne.s32.totalorder %s69, %s71
    %p78 = scmp.eq.s32.totalorder %s19, 1
    %p79 = por %p77, %p78
    %p80 = scmp.ne.s32.totalorder %s71, %s72
    %p81 = scmp.eq.s32.totalorder %s19, 0
    %p82 = por %p80, %p81
    %p83 = scmp.ne.s32.totalorder %s71, %s72
    %p84 = scmp.eq.s32.totalorder %s20, 1
    %p85 = por %p83, %p84
    %p87 = scmp.ne.s32.totalorder %s72, %s86
    %p88 = scmp.eq.s32.totalorder %s20, 0
    %p89 = por %p87, %p88
    %s91 = sadd.s32 %s90, 1
    %p94 = scmp.eq.s32.totalorder %s14, 1
    %p95 = scmp.ne.s32.totalorder %s90, %s92
    %p96 = scmp.eq.s32.totalorder %s14, 0
    %p97 = por %p95, %p96
    %p98 = scmp.ne.s32.totalorder %s90, %s92
    %p99 = scmp.eq.s32.totalorder %s19, 1
    %p100 = por %p98, %p99
    %p101 = scmp.ne.s32.totalorder %s92, %s93
    %p102 = scmp.eq.s32.totalorder %s19, 0
    %p103 = por %p101, %p102
    %p104 = scmp.ne.s32.totalorder %s92, %s93
    %p105 = scmp.eq.s32.totalorder %s20, 1
    %p106 = por %p104, %p105
    %p108 = scmp.ne.s32.totalorder %s93, %s107
    %p109 = scmp.eq.s32.totalorder %s20, 0
    %p110 = por %p108, %p109
    %s112 = sadd.s32 %s111, 1
    %p115 = scmp.eq.s32.totalorder %s14, 1
    %p116 = scmp.ne.s32.totalorder %s111, %s113
    %p117 = scmp.eq.s32.totalorder %s14, 0
    %p118 = por %p116, %p117
    %p119 = scmp.ne.s32.totalorder %s111, %s113
    %p120 = scmp.eq.s32.totalorder %s19, 1
    %p121 = por %p119, %p120
    %p122 = scmp.ne.s32.totalorder %s113, %s114
    %p123 = scmp.eq.s32.totalorder %s19, 0
    %p124 = por %p122, %p123
    %p125 = scmp.ne.s32.totalorder %s113, %s114
    %p126 = scmp.eq.s32.totalorder %s20, 1
    %p127 = por %p125, %p126
    %p129 = scmp.ne.s32.totalorder %s114, %s128
    %p130 = scmp.eq.s32.totalorder %s20, 0
    %p131 = por %p129, %p130
    %s133 = sadd.s32 %s132, 1
    %p136 = scmp.eq.s32.totalorder %s14, 1
    %p137 = scmp.ne.s32.totalorder %s132, %s134
    %p138 = scmp.eq.s32.totalorder %s14, 0
    %p139 = por %p137, %p138
    %p140 = scmp.ne.s32.totalorder %s132, %s134
    %p141 = scmp.eq.s32.totalorder %s19, 1
    %p142 = por %p140, %p141
    %p143 = scmp.ne.s32.totalorder %s134, %s135
    %p144 = scmp.eq.s32.totalorder %s19, 0
    %p145 = por %p143, %p144
    %p146 = scmp.ne.s32.totalorder %s134, %s135
    %p147 = scmp.eq.s32.totalorder %s20, 1
    %p148 = por %p146, %p147
    %p150 = scmp.ne.s32.totalorder %s135, %s149
    %p151 = scmp.eq.s32.totalorder %s20, 0
    %p152 = por %p150, %p151
    %s154 = sadd.s32 %s153, 1
    %p157 = scmp.eq.s32.totalorder %s14, 1
    %p158 = scmp.ne.s32.totalorder %s153, %s155
    %p159 = scmp.eq.s32.totalorder %s14, 0
    %p160 = por %p158, %p159
    %p161 = scmp.ne.s32.totalorder %s153, %s155
    %p162 = scmp.eq.s32.totalorder %s19, 1
    %p163 = por %p161, %p162
    %p164 = scmp.ne.s32.totalorder %s155, %s156
    %p165 = scmp.eq.s32.totalorder %s19, 0
    %p166 = por %p164, %p165
    %p167 = scmp.ne.s32.totalorder %s155, %s156
    %p168 = scmp.eq.s32.totalorder %s20, 1
    %p169 = por %p167, %p168
    %p171 = scmp.ne.s32.totalorder %s156, %s170
    %p172 = scmp.eq.s32.totalorder %s20, 0
    %p173 = por %p171, %p172
    %s175 = sadd.s32 %s174, 1
    %p178 = scmp.eq.s32.totalorder %s14, 1
    %p179 = scmp.ne.s32.totalorder %s174, %s176
    %p180 = scmp.eq.s32.totalorder %s14, 0
    %p181 = por %p179, %p180
    %p182 = scmp.ne.s32.totalorder %s174, %s176
    %p183 = scmp.eq.s32.totalorder %s19, 1
    %p184 = por %p182, %p183
    %p185 = scmp.ne.s32.totalorder %s176, %s177
    %p186 = scmp.eq.s32.totalorder %s19, 0
    %p187 = por %p185, %p186
    %p188 = scmp.ne.s32.totalorder %s176, %s177
    %p189 = scmp.eq.s32.totalorder %s20, 1
    %p190 = por %p188, %p189
    %p192 = scmp.ne.s32.totalorder %s177, %s191
    %p193 = scmp.eq.s32.totalorder %s20, 0
    %p194 = por %p192, %p193
    %s195 = ssub.s32 %s14, %s21
    %p196 = scmp.eq.s32.totalorder %s195, 0
    %s198 = sadd.s32 %s197, 1
    %s199 = scalar_select %p196, %s197, %s198
    %p202 = pneg %p196
    %p203 = scmp.eq.s32.totalorder %s14, 1
    %p204 = por %p202, %p203
    %p205 = scmp.ne.s32.totalorder %s197, %s200
    %p206 = scmp.eq.s32.totalorder %s14, 0
    %p207 = por %p205, %p206
    %p208 = scmp.ne.s32.totalorder %s197, %s200
    %p209 = scmp.eq.s32.totalorder %s19, 1
    %p210 = por %p208, %p209
    %p211 = scmp.ne.s32.totalorder %s200, %s201
    %p212 = scmp.eq.s32.totalorder %s19, 0
    %p213 = por %p211, %p212
    %p214 = scmp.ne.s32.totalorder %s200, %s201
    %p215 = scmp.eq.s32.totalorder %s20, 1
    %p216 = por %p214, %p215
    %p218 = scmp.ne.s32.totalorder %s201, %s217
    %p219 = scmp.eq.s32.totalorder %s20, 0
    %p220 = por %p218, %p219
    %p221 = scmp.le.s32.totalorder 1, %s14
    %p222 = scmp.lt.s32.totalorder %s14, 3
    %p223 = pnand %p221, %p222
    %p224 = pneg %p223
    // Predicated region
    $region9: #{simsiam_forward.1} parent=5 // pred_check
      _
    $region10: #{simsiam_forward.1} parent=5 // pred_check_branch
      %226 = sbr.rel (%p223) target = $region12
    $region11: #{simsiam_forward.1} parent=5 // pred_region
      %s227 = ssub.s32 %s14, 1
      // Predicated region
      $region13: #{simsiam_forward.1} parent=11 // pred_check
        %p228 = pneg %p61
      $region14: #{simsiam_forward.1} parent=11 // pred_check_branch
        %230 = sbr.rel (%p228) target = $region16
      $region15: #{simsiam_forward.1} parent=11 // pred_region
        _
      $region16: #{simsiam_forward.1} parent=11 // pred_fallthru
        _
      // Predicated region
      $region17: #{simsiam_forward.1} parent=11 // pred_check
        %p231 = pneg %p82
      $region18: #{simsiam_forward.1} parent=11 // pred_check_branch
        %233 = sbr.rel (%p231) target = $region20
      $region19: #{simsiam_forward.1} parent=11 // pred_region
        _
      $region20: #{simsiam_forward.1} parent=11 // pred_fallthru
        _
      // Predicated region
      $region21: #{simsiam_forward.1} parent=11 // pred_check
        %p234 = pneg %p103
      $region22: #{simsiam_forward.1} parent=11 // pred_check_branch
        %236 = sbr.rel (%p234) target = $region24
      $region23: #{simsiam_forward.1} parent=11 // pred_region
        _
      $region24: #{simsiam_forward.1} parent=11 // pred_fallthru
        _
      // Predicated region
      $region25: #{simsiam_forward.1} parent=11 // pred_check
        %p237 = pneg %p124
      $region26: #{simsiam_forward.1} parent=11 // pred_check_branch
        %239 = sbr.rel (%p237) target = $region28
      $region27: #{simsiam_forward.1} parent=11 // pred_region
        _
      $region28: #{simsiam_forward.1} parent=11 // pred_fallthru
        _
      // Predicated region
      $region29: #{simsiam_forward.1} parent=11 // pred_check
        %p240 = pneg %p145
      $region30: #{simsiam_forward.1} parent=11 // pred_check_branch
        %242 = sbr.rel (%p240) target = $region32
      $region31: #{simsiam_forward.1} parent=11 // pred_region
        _
      $region32: #{simsiam_forward.1} parent=11 // pred_fallthru
        _
      // Predicated region
      $region33: #{simsiam_forward.1} parent=11 // pred_check
        %p243 = pneg %p166
      $region34: #{simsiam_forward.1} parent=11 // pred_check_branch
        %245 = sbr.rel (%p243) target = $region36
      $region35: #{simsiam_forward.1} parent=11 // pred_region
        _
      $region36: #{simsiam_forward.1} parent=11 // pred_fallthru
        _
      // Predicated region
      $region37: #{simsiam_forward.1} parent=11 // pred_check
        %p246 = pneg %p187
      $region38: #{simsiam_forward.1} parent=11 // pred_check_branch
        %248 = sbr.rel (%p246) target = $region40
      $region39: #{simsiam_forward.1} parent=11 // pred_region
        _
      $region40: #{simsiam_forward.1} parent=11 // pred_fallthru
        _
    $region12: #{simsiam_forward.1} parent=5 // pred_fallthru
      _
    %p249 = scmp.lt.s32.totalorder %s14, 2
    // Predicated region
    $region41: #{simsiam_forward.1} parent=5 // pred_check
      %p250 = pneg %p249
    $region42: #{simsiam_forward.1} parent=5 // pred_check_branch
      %252 = sbr.rel (%p250) target = $region44
    $region43: #{simsiam_forward.1} parent=5 // pred_region
      // Predicated region
      $region45: #{simsiam_forward.1} parent=43 // pred_check
        %p253 = pneg %p34
      $region46: #{simsiam_forward.1} parent=43 // pred_check_branch
        %255 = sbr.rel (%p253) target = $region48
      $region47: #{simsiam_forward.1} parent=43 // pred_region
        %p256 = scmp.lt.s32.totalorder %s14, 1
        %s257 = scalar_select %p256, %s14, 1
        %s258 = smul.addr %s257, 16
        %s259 = smul.addr %s258, 4
        %s260 = scalar_lea.vmem %s0, %s259
      $region48: #{simsiam_forward.1} parent=43 // pred_fallthru
        _
    $region44: #{simsiam_forward.1} parent=5 // pred_fallthru
      _
    %p261 = scmp.le.s32.totalorder 1, %s14
    %p262 = scmp.lt.s32.totalorder %s14, 3
    %p263 = pnand %p261, %p262
    %p264 = pneg %p263
    // Predicated region
    $region49: #{simsiam_forward.1} parent=5 // pred_check
      _
    $region50: #{simsiam_forward.1} parent=5 // pred_check_branch
      %266 = sbr.rel (%p263) target = $region52
    $region51: #{simsiam_forward.1} parent=5 // pred_region
      %s267 = ssub.s32 %s14, 1
      %p268 = scmp.lt.s32.totalorder %s19, 1
      %s269 = scalar_select %p268, %s19, 1
      %s270 = smul.addr %s269, 16
      %s271 = smul.addr %s270, 4
      %s272 = scalar_lea.vmem %s0, %s271
      %p273 = pneg %p40
      %p274 = pneg %p37
      %p275 = pneg %p61
      %p276 = pneg %p58
      %p277 = pneg %p82
      %p278 = pneg %p79
      %p279 = pneg %p103
      %p280 = pneg %p100
      %p281 = pneg %p124
      %p282 = pneg %p121
      %p283 = pneg %p145
      %p284 = pneg %p142
      %p285 = pneg %p166
      %p286 = pneg %p163
      %p287 = pneg %p187
      %p288 = pneg %p184
      %p289 = pneg %p213
      %p290 = pneg %p210
      %p291 = scmp.lt.s32.totalorder %s19, 1
      %s292 = scalar_select %p291, %s19, 1
      %s293 = smul.addr %s292, 8
      %s294 = scalar_lea.vmem %s8, %s293
      %p295 = scmp.lt.s32.totalorder %s19, 1
      %s296 = scalar_select %p295, %s19, 1
      %s297 = smul.addr %s296, 16
      %s298 = smul.addr %s297, 4
      %s299 = scalar_lea.vmem %s0, %s298
      %p300 = scmp.lt.s32.totalorder %s19, 1
      %s301 = scalar_select %p300, %s19, 1
      %s302 = smul.addr %s301, 8
      %s303 = scalar_lea.vmem %s8, %s302
      %v305 = vld [vmem:[%s299] sm:$0xff]
      %v306 = vld [vmem:[%s299 + $0x8] sm:$0xff]
      %v307 = vld [vmem:[%s299 + $0x10] sm:$0xff]
      %v308 = vld [vmem:[%s299 + $0x18] sm:$0xff]
      %v309 = vld [vmem:[%s299 + $0x20] sm:$0xff]
      %v310 = vld [vmem:[%s299 + $0x28] sm:$0xff]
      %v311 = vld [vmem:[%s299 + $0x30] sm:$0xff]
      %v312 = vld [vmem:[%s299 + $0x38] sm:$0xff]
      %321 = vst [vmem:[#allocation1] ss:$2 sm:$0xff] %v305
      %v322 = vld.sshfl [vmem:[#allocation1] sm:$0xff pattern:$0x75316420]
      %v323 = vld.sshfl [vmem:[#allocation1 + $0x8] sm:$0xff pattern:$0x75316420]
      %s324 = scalar_lea.vmem [#allocation1], 16
      %325 = vst [vmem:[%s324] ss:$2 sm:$0xff] %v306
      %v326 = vld.sshfl [vmem:[#allocation1 + $0x10] sm:$0xff pattern:$0x75316420]
      %v327 = vld.sshfl [vmem:[#allocation1 + $0x18] sm:$0xff pattern:$0x75316420]
      %s328 = scalar_lea.vmem [#allocation1], 32
      %329 = vst [vmem:[%s328] ss:$2 sm:$0xff] %v307
      %v330 = vld.sshfl [vmem:[#allocation1 + $0x20] sm:$0xff pattern:$0x75316420]
      %v331 = vld.sshfl [vmem:[#allocation1 + $0x28] sm:$0xff pattern:$0x75316420]
      %s332 = scalar_lea.vmem [#allocation1], 48
      %333 = vst [vmem:[%s332] ss:$2 sm:$0xff] %v308
      %v334 = vld.sshfl [vmem:[#allocation1 + $0x30] sm:$0xff pattern:$0x75316420]
      %v335 = vld.sshfl [vmem:[#allocation1 + $0x38] sm:$0xff pattern:$0x75316420]
      %336 = vst [vmem:[#allocation1] ss:$2 sm:$0xff] %v309
      %v337 = vld.sshfl [vmem:[#allocation1] sm:$0xff pattern:$0x75316420]
      %v338 = vld.sshfl [vmem:[#allocation1 + $0x8] sm:$0xff pattern:$0x75316420]
      %339 = vst [vmem:[%s324] ss:$2 sm:$0xff] %v310
      %v340 = vld.sshfl [vmem:[#allocation1 + $0x10] sm:$0xff pattern:$0x75316420]
      %v341 = vld.sshfl [vmem:[#allocation1 + $0x18] sm:$0xff pattern:$0x75316420]
      %342 = vst [vmem:[%s328] ss:$2 sm:$0xff] %v311
      %v343 = vld.sshfl [vmem:[#allocation1 + $0x20] sm:$0xff pattern:$0x75316420]
      %v344 = vld.sshfl [vmem:[#allocation1 + $0x28] sm:$0xff pattern:$0x75316420]
      %345 = vst [vmem:[%s332] ss:$2 sm:$0xff] %v312
      %v346 = vld.sshfl [vmem:[#allocation1 + $0x30] sm:$0xff pattern:$0x75316420]
      %v347 = vld.sshfl [vmem:[#allocation1 + $0x38] sm:$0xff pattern:$0x75316420]
      %vm364 = vcmask 1043456
      %v365 = vsel %vm364, %v322, 0.0
      %v366 = vsel %vm364, %v323, 0.0
      %v367 = vadd.f32 %v365, %v366
      %368 = vadd.xlane.f32.xlu0 %v367
      %v369 = vpop.xlane.xlu0 %368
      %v370 = vsel %vm364, %v326, 0.0
      %v371 = vsel %vm364, %v327, 0.0
      %v372 = vadd.f32 %v370, %v371
      %373 = vadd.xlane.f32.xlu0 %v372
      %v374 = vpop.xlane.xlu0 %373
      %v375 = vsel %vm364, %v330, 0.0
      %v376 = vsel %vm364, %v331, 0.0
      %v377 = vadd.f32 %v375, %v376
      %378 = vadd.xlane.f32.xlu0 %v377
      %v379 = vpop.xlane.xlu0 %378
      %v380 = vsel %vm364, %v334, 0.0
      %v381 = vsel %vm364, %v335, 0.0
      %v382 = vadd.f32 %v380, %v381
      %383 = vadd.xlane.f32.xlu0 %v382
      %v384 = vpop.xlane.xlu0 %383
      %v385 = vsel %vm364, %v337, 0.0
      %v386 = vsel %vm364, %v338, 0.0
      %v387 = vadd.f32 %v385, %v386
      %388 = vadd.xlane.f32.xlu0 %v387
      %v389 = vpop.xlane.xlu0 %388
      %v390 = vsel %vm364, %v340, 0.0
      %v391 = vsel %vm364, %v341, 0.0
      %v392 = vadd.f32 %v390, %v391
      %393 = vadd.xlane.f32.xlu0 %v392
      %v394 = vpop.xlane.xlu0 %393
      %v395 = vsel %vm364, %v343, 0.0
      %v396 = vsel %vm364, %v344, 0.0
      %v397 = vadd.f32 %v395, %v396
      %398 = vadd.xlane.f32.xlu0 %v397
      %v399 = vpop.xlane.xlu0 %398
      %v400 = vsel %vm364, %v346, 0.0
      %v401 = vsel %vm364, %v347, 0.0
      %v402 = vadd.f32 %v400, %v401
      %403 = vadd.xlane.f32.xlu0 %v402
      %v404 = vpop.xlane.xlu0 %403
      %v405 = vrcp.pop 256.0
      %v406 = vmul.f32 256.0, %v405
      %v407 = vsub.f32 1.0, %v406
      %v408 = vmul.f32 %v405, %v407
      %v409 = vadd.f32 %v405, %v408
      %vm410 = vweird.f32 %v405
      %v411 = vsel %vm410, %v405, %v409
      %v412 = vmul.f32 %v369, %v411
      %v413 = vmul.f32 %v374, %v411
      %v414 = vmul.f32 %v379, %v411
      %v415 = vmul.f32 %v384, %v411
      %v416 = vmul.f32 %v389, %v411
      %v417 = vmul.f32 %v394, %v411
      %v418 = vmul.f32 %v399, %v411
      %v419 = vmul.f32 %v404, %v411
      %v420 = vld [vmem:[%s2] sm:$0x1]
      %v421 = vpack.c.bf16 %v412, %v412
      %v422 = vpack.c.bf16 %v413, %v413
      %v423 = vpack.c.bf16 %v414, %v414
      %v424 = vpack.c.bf16 %v415, %v415
      %v425 = vpack.c.bf16 %v416, %v416
      %v426 = vpack.c.bf16 %v417, %v417
      %v427 = vpack.c.bf16 %v418, %v418
      %v428 = vpack.c.bf16 %v419, %v419
      %v429 = vld [vmem:[%s1] sm:$0x3]
      %v430 = vperm.slane %v420, 0
      %v439 = vunpack.c.l.b16 %v421
      %v440 = vunpack.c.l.b16 %v422
      %v441 = vunpack.c.l.b16 %v423
      %v442 = vunpack.c.l.b16 %v424
      %v443 = vunpack.c.l.b16 %v425
      %v444 = vunpack.c.l.b16 %v426
      %v445 = vunpack.c.l.b16 %v427
      %v446 = vunpack.c.l.b16 %v428
      %v447 = vlaneseq
      %v448 = vand.u32 %v447, 127
      %v449 = vperm.slane %v439, %v448
      %v450 = vperm.slane %v440, %v448
      %v451 = vperm.slane %v441, %v448
      %v452 = vperm.slane %v442, %v448
      %v453 = vperm.slane %v443, %v448
      %v454 = vperm.slane %v444, %v448
      %v455 = vperm.slane %v445, %v448
      %v456 = vperm.slane %v446, %v448
      %vm457 = vcmask 1041409
      %v458 = vsel %vm457, %v450, %v449
      %vm459 = vcmask 1042434
      %v460 = vsel %vm459, %v451, %v458
      %vm461 = vcmask 1043459
      %v462 = vsel %vm461, %v452, %v460
      %vm463 = vcmask 1044484
      %v464 = vsel %vm463, %v453, %v462
      %vm465 = vcmask 1045509
      %v466 = vsel %vm465, %v454, %v464
      %vm467 = vcmask 1046534
      %v468 = vsel %vm467, %v455, %v466
      %vm469 = vcmask 1047559
      %v470 = vsel %vm469, %v456, %v468
      %v471 = vpack.c.b16 %v470, %v470
      %vm472 = vcmask 31744
      %v474 = vsel %vm472, %v471, 0
      %vm476 = vcmask 1041408
      %v478 = vsel %vm476, %v429, 0
      %480 = vmatpush.bf16.msra.mxu0 0
      %481 = vmatpush.bf16.msra.mxu0 0
      %482 = vmatpush.bf16.msra.mxu0 0
      %483 = vmatpush.bf16.msra.mxu0 0
      %484 = vmatpush.bf16.msra.mxu0 0
      %485 = vmatpush.bf16.msra.mxu0 0
      %486 = vmatpush.bf16.msra.mxu0 0
      %487 = vmatpush.bf16.msra.mxu0 %v478
      %488 = vmatmul.bf16.gmra.mxu0 %v474
      %v489 = vpop.f32.mrf.mxu0
      %v490 = vadd.f32 %v430, %v489
      %v491 = vpop.f32.mrf.mxu0
      %492 = vdwg.mxu0
      %v493 = vmax.f32 %v490, 0.0
      %v494 = vpack.c.bf16 %v493, %v493
      %v495 = vld [vmem:[%s3] sm:$0xf]
      %v496 = vld [vmem:[%s3 + $0x4] sm:$0xf]
      %v497 = vld [vmem:[%s3 + $0x8] sm:$0xf]
      %v498 = vld [vmem:[%s3 + $0xc] sm:$0xf]
      %v503 = vunpack.c.l.b16 %v495
      %v504 = vunpack.c.l.b16 %v496
      %v505 = vunpack.c.l.b16 %v497
      %v506 = vunpack.c.l.b16 %v498
      %v507 = vpack.c.b16 %v504, %v503
      %v508 = vpack.c.b16 %v506, %v505
      %vm511 = vcmask 261120
      %v513 = vsel %vm511, %v494, 0
      %515 = vmatpush.bf16.msra.mxu0 0
      %516 = vmatpush.bf16.msra.mxu0 0
      %517 = vmatpush.bf16.msra.mxu0 0
      %518 = vmatpush.bf16.msra.mxu0 0
      %519 = vmatpush.bf16.msra.mxu0 0
      %520 = vmatpush.bf16.msra.mxu0 0
      %521 = vmatpush.bf16.msra.mxu0 %v508
      %522 = vmatpush.bf16.msra.mxu0 %v507
      %523 = vmatmul.bf16.gmra.mxu0 %v513
      %v524 = vpop.f32.mrf.mxu0
      %v525 = vadd.f32 0.0, %v524
      %v526 = vpop.f32.mrf.mxu0
      %527 = vdwg.mxu0
      %v528 = vld [vmem:[%s2 + $0x1] sm:$0x1]
      %v529 = vld [vmem:[%s2 + $0x2] sm:$0x1]
      %v530 = vsel %vm511, %v525, 0.0
      %v531 = vrot.slane %v530, 4
      %v532 = vadd.f32 %v530, %v531
      %v533 = vrot.slane %v532, 2
      %v534 = vadd.f32 %v532, %v533
      %v535 = vrot.slane %v534, 1
      %v536 = vadd.f32 %v534, %v535
      %v537 = vrcp.pop 8.0
      %v538 = vmul.f32 8.0, %v537
      %v539 = vsub.f32 1.0, %v538
      %v540 = vmul.f32 %v537, %v539
      %v541 = vadd.f32 %v537, %v540
      %vm542 = vweird.f32 %v537
      %v543 = vsel %vm542, %v537, %v541
      %v544 = vmul.f32 %v536, %v543
      %v545 = vsub.f32 %v525, %v544
      %v546 = vmul.f32 %v545, %v545
      %v547 = vsel %vm511, %v546, 0.0
      %v548 = vrot.slane %v547, 4
      %v549 = vadd.f32 %v547, %v548
      %v550 = vrot.slane %v549, 2
      %v551 = vadd.f32 %v549, %v550
      %v552 = vrot.slane %v551, 1
      %v553 = vadd.f32 %v551, %v552
      %v554 = vmul.f32 %v553, %v543
      %v555 = vadd.f32 %v554, 1e-05
      %v556 = vrsqrt.pop %v555
      %v557 = vmul.f32 %v556, %v555
      %v558 = vmul.f32 %v557, %v556
      %v559 = vmul.f32 0.5, %v558
      %v560 = vsub.f32 1.5, %v559
      %v561 = vmul.f32 %v556, %v560
      %vm562 = vweird.f32 %v555
      %vm563 = vweird.f32 %v556
      %vm564 = vmor %vm562, %vm563
      %v565 = vsel %vm564, %v556, %v561
      %v566 = vmul.f32 %v545, %v565
      %v567 = vperm.slane %v528, 0
      %v568 = vmul.f32 %v566, %v567
      %v569 = vperm.slane %v529, 0
      %v570 = vadd.f32 %v568, %v569
      %v571 = vmax.f32 %v570, 0.0
      %v572 = vpack.c.bf16 %v571, %v571
      %v573 = vld [vmem:[%s4] sm:$0xf]
      %v574 = vld [vmem:[%s4 + $0x4] sm:$0xf]
      %v575 = vld [vmem:[%s4 + $0x8] sm:$0xf]
      %v576 = vld [vmem:[%s4 + $0xc] sm:$0xf]
      %v581 = vunpack.c.l.b16 %v573
      %v582 = vunpack.c.l.b16 %v574
      %v583 = vunpack.c.l.b16 %v575
      %v584 = vunpack.c.l.b16 %v576
      %v585 = vpack.c.b16 %v582, %v581
      %v586 = vpack.c.b16 %v584, %v583
      %v590 = vsel %vm511, %v572, 0
      %592 = vmatpush.bf16.msra.mxu0 0
      %593 = vmatpush.bf16.msra.mxu0 0
      %594 = vmatpush.bf16.msra.mxu0 0
      %595 = vmatpush.bf16.msra.mxu0 0
      %596 = vmatpush.bf16.msra.mxu0 0
      %597 = vmatpush.bf16.msra.mxu0 0
      %598 = vmatpush.bf16.msra.mxu0 %v586
      %599 = vmatpush.bf16.msra.mxu0 %v585
      %600 = vmatmul.bf16.gmra.mxu0 %v590
      %v601 = vpop.f32.mrf.mxu0
      %v602 = vadd.f32 0.0, %v601
      %v603 = vpop.f32.mrf.mxu0
      %604 = vdwg.mxu0
      %v605 = vld [vmem:[%s2 + $0x3] sm:$0x1]
      %v606 = vld [vmem:[%s2 + $0x4] sm:$0x1]
      %v607 = vsel %vm511, %v602, 0.0
      %v608 = vrot.slane %v607, 4
      %v609 = vadd.f32 %v607, %v608
      %v610 = vrot.slane %v609, 2
      %v611 = vadd.f32 %v609, %v610
      %v612 = vrot.slane %v611, 1
      %v613 = vadd.f32 %v611, %v612
      %v614 = vmul.f32 %v613, %v543
      %v615 = vsub.f32 %v602, %v614
      %v616 = vmul.f32 %v615, %v615
      %v617 = vsel %vm511, %v616, 0.0
      %v618 = vrot.slane %v617, 4
      %v619 = vadd.f32 %v617, %v618
      %v620 = vrot.slane %v619, 2
      %v621 = vadd.f32 %v619, %v620
      %v622 = vrot.slane %v621, 1
      %v623 = vadd.f32 %v621, %v622
      %v624 = vmul.f32 %v623, %v543
      %v625 = vadd.f32 %v624, 1e-05
      %v626 = vrsqrt.pop %v625
      %v627 = vmul.f32 %v626, %v625
      %v628 = vmul.f32 %v627, %v626
      %v629 = vmul.f32 0.5, %v628
      %v630 = vsub.f32 1.5, %v629
      %v631 = vmul.f32 %v626, %v630
      %vm632 = vweird.f32 %v625
      %vm633 = vweird.f32 %v626
      %vm634 = vmor %vm632, %vm633
      %v635 = vsel %vm634, %v626, %v631
      %v636 = vmul.f32 %v615, %v635
      %v637 = vperm.slane %v605, 0
      %v638 = vmul.f32 %v636, %v637
      %v639 = vperm.slane %v606, 0
      %v640 = vadd.f32 %v638, %v639
      %v641 = vmax.f32 %v640, 0.0
      %v642 = vpack.c.bf16 %v641, %v641
      %v643 = vld [vmem:[%s5] sm:$0xf]
      %v644 = vld [vmem:[%s5 + $0x4] sm:$0xf]
      %v645 = vld [vmem:[%s5 + $0x8] sm:$0xf]
      %v646 = vld [vmem:[%s5 + $0xc] sm:$0xf]
      %v651 = vunpack.c.l.b16 %v643
      %v652 = vunpack.c.l.b16 %v644
      %v653 = vunpack.c.l.b16 %v645
      %v654 = vunpack.c.l.b16 %v646
      %v655 = vpack.c.b16 %v652, %v651
      %v656 = vpack.c.b16 %v654, %v653
      %v660 = vsel %vm511, %v642, 0
      %662 = vmatpush.bf16.msra.mxu0 0
      %663 = vmatpush.bf16.msra.mxu0 0
      %664 = vmatpush.bf16.msra.mxu0 0
      %665 = vmatpush.bf16.msra.mxu0 0
      %666 = vmatpush.bf16.msra.mxu0 0
      %667 = vmatpush.bf16.msra.mxu0 0
      %668 = vmatpush.bf16.msra.mxu0 %v656
      %669 = vmatpush.bf16.msra.mxu0 %v655
      %670 = vmatmul.bf16.gmra.mxu0 %v660
      %v671 = vpop.f32.mrf.mxu0
      %v672 = vadd.f32 0.0, %v671
      %v673 = vpop.f32.mrf.mxu0
      %674 = vdwg.mxu0
      %vm675 = vcmask 523264
      %v676 = vsel %vm675, %v672, 0.0
      %v677 = vrot.slane %v676, 4
      %v678 = vadd.f32 %v676, %v677
      %v679 = vrot.slane %v678, 2
      %v680 = vadd.f32 %v678, %v679
      %v681 = vrot.slane %v680, 1
      %v682 = vadd.f32 %v680, %v681
      %v683 = vmul.f32 %v682, %v543
      %v684 = vsub.f32 %v672, %v683
      %v685 = vmul.f32 %v684, %v684
      %v686 = vsel %vm675, %v685, 0.0
      %v687 = vrot.slane %v686, 4
      %v688 = vadd.f32 %v686, %v687
      %v689 = vrot.slane %v688, 2
      %v690 = vadd.f32 %v688, %v689
      %v691 = vrot.slane %v690, 1
      %v692 = vadd.f32 %v690, %v691
      %v693 = vmul.f32 %v692, %v543
      %v694 = vadd.f32 %v693, 1e-05
      %v695 = vrsqrt.pop %v694
      %v696 = vmul.f32 %v695, %v694
      %v697 = vmul.f32 %v696, %v695
      %v698 = vmul.f32 0.5, %v697
      %v699 = vsub.f32 1.5, %v698
      %v700 = vmul.f32 %v695, %v699
      %vm701 = vweird.f32 %v694
      %vm702 = vweird.f32 %v695
      %vm703 = vmor %vm701, %vm702
      %v704 = vsel %vm703, %v695, %v700
      %v705 = vmul.f32 %v684, %v704
      %v706 = vpack.c.bf16 %v705, %v705
      %v707 = vld [vmem:[%s6] sm:$0xf]
      %v708 = vld [vmem:[%s6 + $0x4] sm:$0xf]
      %v709 = vld [vmem:[%s6 + $0x8] sm:$0xf]
      %v710 = vld [vmem:[%s6 + $0xc] sm:$0xf]
      %v711 = vld [vmem:[%s6 + $0x10] sm:$0xf]
      %v712 = vld [vmem:[%s6 + $0x14] sm:$0xf]
      %v713 = vld [vmem:[%s6 + $0x18] sm:$0xf]
      %v714 = vld [vmem:[%s6 + $0x1c] sm:$0xf]
      %v723 = vunpack.c.l.b16 %v707
      %v724 = vunpack.c.l.b16 %v708
      %v725 = vunpack.c.l.b16 %v709
      %v726 = vunpack.c.l.b16 %v710
      %v727 = vunpack.c.l.b16 %v711
      %v728 = vunpack.c.l.b16 %v712
      %v729 = vunpack.c.l.b16 %v713
      %v730 = vunpack.c.l.b16 %v714
      %v731 = vpack.c.b16 %v724, %v723
      %v732 = vpack.c.b16 %v726, %v725
      %v733 = vpack.c.b16 %v728, %v727
      %v734 = vpack.c.b16 %v730, %v729
      %v740 = vsel %vm675, %v706, 0
      %742 = vmatpush.bf16.msra.mxu0 0
      %743 = vmatpush.bf16.msra.mxu0 0
      %744 = vmatpush.bf16.msra.mxu0 0
      %745 = vmatpush.bf16.msra.mxu0 0
      %746 = vmatpush.bf16.msra.mxu0 %v734
      %747 = vmatpush.bf16.msra.mxu0 %v733
      %748 = vmatpush.bf16.msra.mxu0 %v732
      %749 = vmatpush.bf16.msra.mxu0 %v731
      %750 = vmatmul.bf16.gmra.mxu0 %v740
      %v751 = vpop.f32.mrf.mxu0
      %v752 = vadd.f32 0.0, %v751
      %v753 = vpop.f32.mrf.mxu0
      %754 = vdwg.mxu0
      %v755 = vld [vmem:[%s2 + $0x5] sm:$0x1]
      %v756 = vld [vmem:[%s2 + $0x6] sm:$0x1]
      %v757 = vsel %vm511, %v752, 0.0
      %v758 = vrot.slane %v757, 4
      %v759 = vadd.f32 %v757, %v758
      %v760 = vrot.slane %v759, 2
      %v761 = vadd.f32 %v759, %v760
      %v762 = vrot.slane %v761, 1
      %v763 = vadd.f32 %v761, %v762
      %v764 = vmul.f32 %v763, %v543
      %v765 = vsub.f32 %v752, %v764
      %v766 = vmul.f32 %v765, %v765
      %v767 = vsel %vm511, %v766, 0.0
      %v768 = vrot.slane %v767, 4
      %v769 = vadd.f32 %v767, %v768
      %v770 = vrot.slane %v769, 2
      %v771 = vadd.f32 %v769, %v770
      %v772 = vrot.slane %v771, 1
      %v773 = vadd.f32 %v771, %v772
      %v774 = vmul.f32 %v773, %v543
      %v775 = vadd.f32 %v774, 1e-05
      %v776 = vrsqrt.pop %v775
      %v777 = vmul.f32 %v776, %v775
      %v778 = vmul.f32 %v777, %v776
      %v779 = vmul.f32 0.5, %v778
      %v780 = vsub.f32 1.5, %v779
      %v781 = vmul.f32 %v776, %v780
      %vm782 = vweird.f32 %v775
      %vm783 = vweird.f32 %v776
      %vm784 = vmor %vm782, %vm783
      %v785 = vsel %vm784, %v776, %v781
      %v786 = vmul.f32 %v765, %v785
      %v787 = vperm.slane %v755, 0
      %v788 = vmul.f32 %v786, %v787
      %v789 = vperm.slane %v756, 0
      %v790 = vadd.f32 %v788, %v789
      %v791 = vmax.f32 %v790, 0.0
      %v792 = vpack.c.bf16 %v791, %v791
      %v793 = vld [vmem:[%s7] sm:$0xf]
      %v794 = vld [vmem:[%s7 + $0x4] sm:$0xf]
      %v795 = vld [vmem:[%s7 + $0x8] sm:$0xf]
      %v796 = vld [vmem:[%s7 + $0xc] sm:$0xf]
      %v797 = vld [vmem:[%s2 + $0x7] sm:$0x1]
      %v798 = vperm.slane %v797, 0
      %v803 = vunpack.c.l.b16 %v793
      %v804 = vunpack.c.l.b16 %v794
      %v805 = vunpack.c.l.b16 %v795
      %v806 = vunpack.c.l.b16 %v796
      %v807 = vpack.c.b16 %v804, %v803
      %v808 = vpack.c.b16 %v806, %v805
      %v812 = vsel %vm511, %v792, 0
      %814 = vmatpush.bf16.msra.mxu0 0
      %815 = vmatpush.bf16.msra.mxu0 0
      %816 = vmatpush.bf16.msra.mxu0 0
      %817 = vmatpush.bf16.msra.mxu0 0
      %818 = vmatpush.bf16.msra.mxu0 0
      %819 = vmatpush.bf16.msra.mxu0 0
      %820 = vmatpush.bf16.msra.mxu0 %v808
      %821 = vmatpush.bf16.msra.mxu0 %v807
      %822 = vmatmul.bf16.gmra.mxu0 %v812
      %v823 = vpop.f32.mrf.mxu0
      %v824 = vadd.f32 %v798, %v823
      %v825 = vpop.f32.mrf.mxu0
      %826 = vdwg.mxu0
      %828 = vrot.lane.b32.xlu0 %v824, 64
      %v829 = vpop.permute.xlu0 %828
      %v831 = vsel %vm675, %v705, %v829
      %832 = vst [vmem:[%s303] sm:$0xff] %v831
      %p833 = scmp.lt.s32.totalorder %s19, 1
      %s834 = scalar_select %p833, %s19, 1
      %s835 = smul.addr %s834, 8
      %s836 = scalar_lea.vmem %s8, %s835
      // Predicated region
      $region53: #{simsiam_forward.1} parent=51 // pred_check
        %p837 = pneg %p210
      $region54: #{simsiam_forward.1} parent=51 // pred_check_branch
        %839 = sbr.rel (%p837) target = $region56
      $region55: #{simsiam_forward.1} parent=51 // pred_region
        _
      $region56: #{simsiam_forward.1} parent=51 // pred_fallthru
        _
    $region52: #{simsiam_forward.1} parent=5 // pred_fallthru
      _
    %p840 = scmp.le.s32.totalorder 2, %s14
    // Predicated region
    $region57: #{simsiam_forward.1} parent=5 // pred_check
      %p841 = pneg %p840
    $region58: #{simsiam_forward.1} parent=5 // pred_check_branch
      %843 = sbr.rel (%p841) target = $region60
    $region59: #{simsiam_forward.1} parent=5 // pred_region
      %s844 = ssub.s32 %s14, 2
      // Predicated region
      $region61: #{simsiam_forward.1} parent=59 // pred_check
        %p845 = pneg %p216
      $region62: #{simsiam_forward.1} parent=59 // pred_check_branch
        %847 = sbr.rel (%p845) target = $region64
      $region63: #{simsiam_forward.1} parent=59 // pred_region
        %p848 = scmp.lt.s32.totalorder %s20, 1
        %s849 = scalar_select %p848, %s20, 1
        %s850 = smul.addr %s849, 8
        %s851 = scalar_lea.vmem %s8, %s850
      $region64: #{simsiam_forward.1} parent=59 // pred_fallthru
        _
    $region60: #{simsiam_forward.1} parent=5 // pred_fallthru
      _
  $region6: #{simsiam_forward.1} parent=0 // loop_footer
    %s18 = sadd.s32 1, %s14
  $region7: #{simsiam_forward.1} parent=0 // loop_footer_branch
    %13 = sbr.rel target = $region3
  $region8: #{simsiam_forward.1} parent=0 // loop_exit
    _

</llo_original>
